<compile_context>
chip_gen: v5e
topology: v5e:2x2
jax: 0.10.0
libtpu: 0.0.40
codegen_flags: <defaults>
</compile_context>

<pallas_src>
import jax
import jax.numpy as jnp
from jax.experimental import pallas as pl
from jax.experimental.pallas import tpu as pltpu

LANE = 128      # TPU vreg lane width
SUBLANE = 8     # TPU vreg sublane count (f32)


def _round_up(x, m):
    return (x + m - 1) // m * m


# ----------------------------------------------------------------------------
# Kernel
# ----------------------------------------------------------------------------
def resmlp_kernel(x_ref, w1_ref, b1_ref, w2_ref, b2_ref, w3_ref, b3_ref, o_ref):
    x = x_ref[...]                                                   # (TILE_S, E_pad)
    # Linear(E -> B) + ReLU
    h1 = jnp.dot(x, w1_ref[...], preferred_element_type=jnp.float32) + b1_ref[...]
    h1 = jnp.maximum(h1, 0.0)
    # Linear(B -> B//2) + Tanh
    h2 = jnp.dot(h1, w2_ref[...], preferred_element_type=jnp.float32) + b2_ref[...]
    h2 = jnp.tanh(h2)
    # Linear(B//2 -> E)
    h3 = jnp.dot(h2, w3_ref[...], preferred_element_type=jnp.float32) + b3_ref[...]
    # Residual connection
    o_ref[...] = (h3 + x).astype(o_ref.dtype)


# ----------------------------------------------------------------------------
# One-time parameter preparation (outside the per-call path)
# ----------------------------------------------------------------------------
def prepare_params(params, emb_dimension):
    """Transpose PyTorch (out, in) weights to (in, out), reshape biases to
    (1, out) rows, and zero-pad the emb / bottleneck dims to lane multiples.
    Call ONCE; the result is reused for every forward call."""
    E = emb_dimension
    B = params["w1"].shape[0]
    B2 = params["w2"].shape[0]
    E_pad = _round_up(E, LANE)
    B_pad = _round_up(B, LANE)
    B2_pad = _round_up(B2, LANE)

    def pad2(a, rows, cols):
        return jnp.pad(a, ((0, rows - a.shape[0]), (0, cols - a.shape[1])))

    return {
        "w1": pad2(params["w1"].T, E_pad, B_pad),            # (E_pad,  B_pad)
        "b1": pad2(params["b1"].reshape(1, -1), 1, B_pad),    # (1,      B_pad)
        "w2": pad2(params["w2"].T, B_pad, B2_pad),            # (B_pad,  B2_pad)
        "b2": pad2(params["b2"].reshape(1, -1), 1, B2_pad),   # (1,      B2_pad)
        "w3": pad2(params["w3"].T, B2_pad, E_pad),            # (B2_pad, E_pad)
        "b3": pad2(params["b3"].reshape(1, -1), 1, E_pad),    # (1,      E_pad)
        "E": E, "E_pad": E_pad, "B": B, "B_pad": B_pad, "B2": B2, "B2_pad": B2_pad,
    }


# ----------------------------------------------------------------------------
# Forward wrapper
# ----------------------------------------------------------------------------
def resmlp_forward(x, prep, *, max_tile_s=512):
    """x: (S, E) float32. prep: output of prepare_params (pre-transposed/padded)."""
    S, E = x.shape
    assert E == prep["E"]
    E_pad, B_pad, B2_pad = prep["E_pad"], prep["B_pad"], prep["B2_pad"]
    B, B2 = prep["B"], prep["B2"]

    # Sequence tiling: large tiles (<= max_tile_s rows) for pipelining; pad S.
    tile_s = min(max_tile_s, _round_up(S, SUBLANE))
    S_pad = _round_up(S, tile_s)
    grid = (S_pad // tile_s,)

    if (S_pad, E_pad) != (S, E):
        x_in = jnp.pad(x, ((0, S_pad - S), (0, E_pad - E)))
    else:
        x_in = x

    # Explicit VMEM budget: double-buffered x/out tiles + resident weights/biases
    # + h1/h2 intermediates + headroom. Kept far under v7x's 64 MiB.
    f32 = 4
    tile_bytes = tile_s * E_pad * f32
    weight_bytes = (E_pad * B_pad + B_pad * B2_pad + B2_pad * E_pad
                    + B_pad + B2_pad + E_pad) * f32
    interm_bytes = tile_s * (B_pad + B2_pad) * f32
    vmem_bytes = 2 * (2 * tile_bytes + weight_bytes) + 2 * interm_bytes + (4 << 20)
    vmem_bytes = int(min(vmem_bytes, 48 << 20))

    cost = pl.CostEstimate(
        flops=2 * S * (E * B + B * B2 + B2 * E),
        transcendentals=S * B2,
        bytes_accessed=f32 * (2 * S * E + E * B + B * B2 + B2 * E + B + B2 + E),
    )

    resident = lambda shape: pl.BlockSpec(shape, lambda i: (0, 0))
    row_tiled = pl.BlockSpec((tile_s, E_pad), lambda i: (i, 0))

    out_padded = pl.pallas_call(
        resmlp_kernel,
        out_shape=jax.ShapeDtypeStruct((S_pad, E_pad), jnp.float32),
        grid=grid,
        in_specs=[
            row_tiled,                       # x
            resident(prep["w1"].shape), resident(prep["b1"].shape),
            resident(prep["w2"].shape), resident(prep["b2"].shape),
            resident(prep["w3"].shape), resident(prep["b3"].shape),
        ],
        out_specs=row_tiled,
        input_output_aliases={0: 0},         # reuse x's HBM buffer for the output
        compiler_params=pltpu.CompilerParams(
            dimension_semantics=("parallel",),
            vmem_limit_bytes=vmem_bytes,
        ),
        cost_estimate=cost,
    )(x_in, prep["w1"], prep["b1"], prep["w2"], prep["b2"], prep["w3"], prep["b3"])

    if (S_pad, E_pad) != (S, E):
        return out_padded[:S, :E]
    return out_padded


# ----------------------------------------------------------------------------
# Synthetic init + pure-JAX reference
# ----------------------------------------------------------------------------
def init_params(key, emb_dimension, bottleneck_size):
    """Deterministic synthetic init (Kaiming-uniform-ish), PyTorch (out, in) layout."""
    b2_size = bottleneck_size // 2
    ks = jax.random.split(key, 6)

    def lin(kw, kb, fan_in, fan_out):
        bound = 1.0 / jnp.sqrt(fan_in)
        w = jax.random.uniform(kw, (fan_out, fan_in), jnp.float32, -bound, bound)
        b = jax.random.uniform(kb, (fan_out,), jnp.float32, -bound, bound)
        return w, b

    w1, b1 = lin(ks[0], ks[1], emb_dimension, bottleneck_size)
    w2, b2 = lin(ks[2], ks[3], bottleneck_size, b2_size)
    w3, b3 = lin(ks[4], ks[5], b2_size, emb_dimension)
    return {"w1": w1, "b1": b1, "w2": w2, "b2": b2, "w3": w3, "b3": b3}


def reference_forward(x, params):
    """Pure-JAX reference matching the PyTorch forward."""
    h = jnp.maximum(x @ params["w1"].T + params["b1"], 0.0)
    h = jnp.tanh(h @ params["w2"].T + params["b2"])
    h = h @ params["w3"].T + params["b3"]
    return h + x


if __name__ == "__main__":
    # Soft prompt: 8 tokens, T5-small embedding dim 512 (module default),
    # bottleneck 16 (-> 8). Emb dim is lane-dense (multiple of 128).
    SEQ, EMB, BOTTLENECK = 8, 512, 16

    key = jax.random.PRNGKey(0)
    k_x, k_p = jax.random.split(key)
    x = jax.random.normal(k_x, (SEQ, EMB), dtype=jnp.float32)
    params = init_params(k_p, EMB, BOTTLENECK)

    prep = prepare_params(params, EMB)        # one-time weight prep
    out = resmlp_forward(x, prep)
    out = jax.block_until_ready(out)

    ref = reference_forward(x, params)
    assert out.shape == (SEQ, EMB)
    assert jnp.allclose(out, ref, atol=2e-3, rtol=2e-3), "mismatch vs pure-JAX reference"

    print("KERNEL_OK")
</pallas_src>

<mosaic_0001>
module attributes {stable_mosaic.version = 11 : i64} {
  func.func @resmlp_kernel(%arg0: i32, %arg1: memref<8x512xf32, #tpu.memory_space<vmem>>, %arg2: memref<512x128xf32, #tpu.memory_space<vmem>>, %arg3: memref<1x128xf32, #tpu.memory_space<vmem>>, %arg4: memref<128x128xf32, #tpu.memory_space<vmem>>, %arg5: memref<1x128xf32, #tpu.memory_space<vmem>>, %arg6: memref<128x512xf32, #tpu.memory_space<vmem>>, %arg7: memref<1x512xf32, #tpu.memory_space<vmem>>, %arg8: memref<8x512xf32, #tpu.memory_space<vmem>>) attributes {dimension_semantics = [#tpu.dimension_semantics<parallel>], iteration_bounds = array<i64: 1>, scalar_prefetch = 0 : i64, scratch_operands = 0 : i64, tpu.core_type = #tpu.core_type<tc>, window_params = [{transform_indices = @transform_0, window_bounds = array<i64: 8, 512>}, {pipeline_mode = #tpu.pipeline_mode<synchronous>, transform_indices = @transform_1, window_bounds = array<i64: 512, 128>}, {pipeline_mode = #tpu.pipeline_mode<synchronous>, transform_indices = @transform_2, window_bounds = array<i64: 1, 128>}, {pipeline_mode = #tpu.pipeline_mode<synchronous>, transform_indices = @transform_3, window_bounds = array<i64: 128, 128>}, {pipeline_mode = #tpu.pipeline_mode<synchronous>, transform_indices = @transform_4, window_bounds = array<i64: 1, 128>}, {pipeline_mode = #tpu.pipeline_mode<synchronous>, transform_indices = @transform_5, window_bounds = array<i64: 128, 512>}, {pipeline_mode = #tpu.pipeline_mode<synchronous>, transform_indices = @transform_6, window_bounds = array<i64: 1, 512>}, {transform_indices = @transform_7, window_bounds = array<i64: 8, 512>}]} {
    %c0 = arith.constant 0 : index
    %c0_0 = arith.constant 0 : index
    %0 = vector.load %arg1[%c0, %c0_0] : memref<8x512xf32, #tpu.memory_space<vmem>>, vector<8x512xf32>
    %c0_1 = arith.constant 0 : index
    %c0_2 = arith.constant 0 : index
    %1 = vector.load %arg2[%c0_1, %c0_2] : memref<512x128xf32, #tpu.memory_space<vmem>>, vector<512x128xf32>
    %cst = arith.constant dense<0.000000e+00> : vector<8x128xf32>
    %2 = tpu.matmul %0, %1, %cst {dimension_numbers = #tpu.dot_dimension_numbers<[1], [0], [0], [1], [0, 0, 1, 1], [], []>} : vector<8x512xf32>, vector<512x128xf32>, vector<8x128xf32> -> vector<8x128xf32>
    %c0_3 = arith.constant 0 : index
    %c0_4 = arith.constant 0 : index
    %3 = vector.load %arg3[%c0_3, %c0_4] : memref<1x128xf32, #tpu.memory_space<vmem>>, vector<1x128xf32>
    %4 = vector.broadcast %3 : vector<1x128xf32> to vector<8x128xf32>
    %5 = arith.addf %2, %4 : vector<8x128xf32>
    %cst_5 = arith.constant 0.000000e+00 : f32
    %6 = vector.broadcast %cst_5 : f32 to vector<8x128xf32>
    %7 = arith.maximumf %5, %6 : vector<8x128xf32>
    %c0_6 = arith.constant 0 : index
    %c0_7 = arith.constant 0 : index
    %8 = vector.load %arg4[%c0_6, %c0_7] : memref<128x128xf32, #tpu.memory_space<vmem>>, vector<128x128xf32>
    %cst_8 = arith.constant dense<0.000000e+00> : vector<8x128xf32>
    %9 = tpu.matmul %7, %8, %cst_8 {dimension_numbers = #tpu.dot_dimension_numbers<[1], [0], [0], [1], [0, 0, 1, 1], [], []>} : vector<8x128xf32>, vector<128x128xf32>, vector<8x128xf32> -> vector<8x128xf32>
    %c0_9 = arith.constant 0 : index
    %c0_10 = arith.constant 0 : index
    %10 = vector.load %arg5[%c0_9, %c0_10] : memref<1x128xf32, #tpu.memory_space<vmem>>, vector<1x128xf32>
    %11 = vector.broadcast %10 : vector<1x128xf32> to vector<8x128xf32>
    %12 = arith.addf %9, %11 : vector<8x128xf32>
    %13 = math.tanh %12 : vector<8x128xf32>
    %c0_11 = arith.constant 0 : index
    %c0_12 = arith.constant 0 : index
    %14 = vector.load %arg6[%c0_11, %c0_12] : memref<128x512xf32, #tpu.memory_space<vmem>>, vector<128x512xf32>
    %cst_13 = arith.constant dense<0.000000e+00> : vector<8x512xf32>
    %15 = tpu.matmul %13, %14, %cst_13 {dimension_numbers = #tpu.dot_dimension_numbers<[1], [0], [0], [1], [0, 0, 1, 1], [], []>} : vector<8x128xf32>, vector<128x512xf32>, vector<8x512xf32> -> vector<8x512xf32>
    %c0_14 = arith.constant 0 : index
    %c0_15 = arith.constant 0 : index
    %16 = vector.load %arg7[%c0_14, %c0_15] : memref<1x512xf32, #tpu.memory_space<vmem>>, vector<1x512xf32>
    %17 = vector.broadcast %16 : vector<1x512xf32> to vector<8x512xf32>
    %18 = arith.addf %15, %17 : vector<8x512xf32>
    %19 = arith.addf %18, %0 : vector<8x512xf32>
    %c0_16 = arith.constant 0 : index
    %c0_17 = arith.constant 0 : index
    %20 = vector.load %arg8[%c0_16, %c0_17] : memref<8x512xf32, #tpu.memory_space<vmem>>, vector<8x512xf32>
    tpu.vector_store %arg8[%c0_16, %c0_17], %19 {strides = array<i32>} : memref<8x512xf32, #tpu.memory_space<vmem>>, vector<8x512xf32>,
    return
  }
  func.func @transform_0(%arg0: i32) -> (i32, i32) {
    %c0_i32 = arith.constant 0 : i32
    %c0_i32_0 = arith.constant 0 : i32
    return %arg0, %c0_i32 : i32, i32
  }
  func.func @transform_1(%arg0: i32) -> (i32, i32) {
    %c0_i32 = arith.constant 0 : i32
    %c0_i32_0 = arith.constant 0 : i32
    %c0_i32_1 = arith.constant 0 : i32
    return %c0_i32, %c0_i32_0 : i32, i32
  }
  func.func @transform_2(%arg0: i32) -> (i32, i32) {
    %c0_i32 = arith.constant 0 : i32
    %c0_i32_0 = arith.constant 0 : i32
    %c0_i32_1 = arith.constant 0 : i32
    return %c0_i32, %c0_i32_0 : i32, i32
  }
  func.func @transform_3(%arg0: i32) -> (i32, i32) {
    %c0_i32 = arith.constant 0 : i32
    %c0_i32_0 = arith.constant 0 : i32
    %c0_i32_1 = arith.constant 0 : i32
    return %c0_i32, %c0_i32_0 : i32, i32
  }
  func.func @transform_4(%arg0: i32) -> (i32, i32) {
    %c0_i32 = arith.constant 0 : i32
    %c0_i32_0 = arith.constant 0 : i32
    %c0_i32_1 = arith.constant 0 : i32
    return %c0_i32, %c0_i32_0 : i32, i32
  }
  func.func @transform_5(%arg0: i32) -> (i32, i32) {
    %c0_i32 = arith.constant 0 : i32
    %c0_i32_0 = arith.constant 0 : i32
    %c0_i32_1 = arith.constant 0 : i32
    return %c0_i32, %c0_i32_0 : i32, i32
  }
  func.func @transform_6(%arg0: i32) -> (i32, i32) {
    %c0_i32 = arith.constant 0 : i32
    %c0_i32_0 = arith.constant 0 : i32
    %c0_i32_1 = arith.constant 0 : i32
    return %c0_i32, %c0_i32_0 : i32, i32
  }
  func.func @transform_7(%arg0: i32) -> (i32, i32) {
    %c0_i32 = arith.constant 0 : i32
    %c0_i32_0 = arith.constant 0 : i32
    return %arg0, %c0_i32 : i32, i32
  }
}

</mosaic_0001>

<llo_original>
// kernel: tpu_custom_call.1
$region0: #{tpu_custom_call.1}
  #allocation0 [shape = 'u32[]', space=smem, size = 0x4, offset = 0x4, fixed_abs, tag = 'smem constant byte address 0x4 - core index']
  #allocation1 [shape = 'u32[72,128]{1,0:T(1,128)}', space=vmem, size = 0x9000, scoped, tag = 'internal scratch']
  %s0 = inlined_call_operand.hbm [shape: f32[8,512], index: 0, kind: input, shape index: {}, may-alias: {0,7}]
  %s1 = inlined_call_operand.hbm [shape: f32[512,128], index: 1, kind: input, shape index: {}]
  %s2 = inlined_call_operand.vmem [shape: f32[1,128], index: 2, kind: input, shape index: {}]
  %s3 = inlined_call_operand.hbm [shape: f32[128,128], index: 3, kind: input, shape index: {}]
  %s4 = inlined_call_operand.vmem [shape: f32[1,128], index: 4, kind: input, shape index: {}]
  %s5 = inlined_call_operand.hbm [shape: f32[128,512], index: 5, kind: input, shape index: {}]
  %s6 = inlined_call_operand.vmem [shape: f32[1,512], index: 6, kind: input, shape index: {}]
  %s7 = inlined_call_operand.hbm [shape: f32[8,512], index: 7, kind: output, shape index: {}, may-alias: {0,7}]
  %s8 = sld [smem:[#allocation0]]
  $region54: #{tpu_custom_call.1} parent=0
    _
  %s10 = ssub.s32 1, %s8
  %s11 = scalar_select 0, %s10, %s8
  $region1: #{tpu_custom_call.1} parent=0
    #allocation2 [shape = 'u8[16384]{0}', space=vmem, size = 0x4000, scoped, tag = 'input window, operand 0, single buffered']
    #allocation3 [shape = 's32[1]{0}', space=sflag, size = 0x4, scoped, tag = 'scoped memory for tpu_custom_call.1']
    #allocation4 [shape = 's32[1]{0}', space=sflag, size = 0x4, scoped, tag = 'scoped memory for tpu_custom_call.1']
    #allocation5 [shape = 'u8[262144]{0}', space=vmem, size = 0x40000, scoped, tag = 'input window, operand 1, single buffered']
    #allocation6 [shape = 's32[1]{0}', space=sflag, size = 0x4, scoped, tag = 'scoped memory for tpu_custom_call.1']
    #allocation7 [shape = 'u8[65536]{0}', space=vmem, size = 0x10000, scoped, tag = 'input window, operand 3, single buffered']
    #allocation8 [shape = 'u8[262144]{0}', space=vmem, size = 0x40000, scoped, tag = 'input window, operand 5, single buffered']
    #allocation9 [shape = 's32[1]{0}', space=sflag, size = 0x4, scoped, tag = 'scoped memory for tpu_custom_call.1']
    #allocation10 [shape = 'u8[16384]{0}', space=vmem, size = 0x4000, scoped, tag = 'output window, operand 0, single buffered']
    %12 = vsyncpa [#allocation3], 0
    %13 = vsyncpa [#allocation6], 0
    %14 = vsyncpa [#allocation9], 0
    %15 = vsyncpa [#allocation4], 0
    // Predicated region
    $region2: #{tpu_custom_call.1} parent=1 // pred_check
      _
    $region3: #{tpu_custom_call.1} parent=1 // pred_check_branch
      %17 = sbr.rel (0) target = $region5
    $region4: #{tpu_custom_call.1} parent=1 // pred_region
      %19 = vsyncadd [#allocation3], 0
      %s21 = sshll.u32 %s0, 4
      %s22 = int_to_ptr.hbm [resolvable:$true] %s21
      %s23 = sshll.u32 [#allocation2], 4
      %s24 = int_to_ptr.vmem [resolvable:$true] %s23
      %26 = dma.hbm_to_vmem [thread:$0]  %s22, 512, %s24, [#allocation3]
    $region5: #{tpu_custom_call.1} parent=1 // pred_fallthru
      _
    // Predicated region
    $region6: #{tpu_custom_call.1} parent=1 // pred_check
      _
    $region7: #{tpu_custom_call.1} parent=1 // pred_check_branch
      %28 = sbr.rel (0) target = $region9
    $region8: #{tpu_custom_call.1} parent=1 // pred_region
      %30 = vsyncadd [#allocation6], 0
      %s31 = sshll.u32 %s1, 4
      %s32 = int_to_ptr.hbm [resolvable:$true] %s31
      %s33 = sshll.u32 [#allocation5], 4
      %s34 = int_to_ptr.vmem [resolvable:$true] %s33
      %39 = dma.hbm_to_vmem [thread:$0]  %s32, 8192, %s34, [#allocation6], 128, 128, 8
    $region9: #{tpu_custom_call.1} parent=1 // pred_fallthru
      _
    // Predicated region
    $region10: #{tpu_custom_call.1} parent=1 // pred_check
      _
    $region11: #{tpu_custom_call.1} parent=1 // pred_check_branch
      %41 = sbr.rel (0) target = $region13
    $region12: #{tpu_custom_call.1} parent=1 // pred_region
      _
    $region13: #{tpu_custom_call.1} parent=1 // pred_fallthru
      _
    // Predicated region
    $region14: #{tpu_custom_call.1} parent=1 // pred_check
      _
    $region15: #{tpu_custom_call.1} parent=1 // pred_check_branch
      %43 = sbr.rel (0) target = $region17
    $region16: #{tpu_custom_call.1} parent=1 // pred_region
      %45 = vsyncadd [#allocation6], 0
      %s46 = sshll.u32 %s3, 4
      %s47 = int_to_ptr.hbm [resolvable:$true] %s46
      %s48 = sshll.u32 [#allocation7], 4
      %s49 = int_to_ptr.vmem [resolvable:$true] %s48
      %54 = dma.hbm_to_vmem [thread:$0]  %s47, 2048, %s49, [#allocation6], 128, 128, 8
    $region17: #{tpu_custom_call.1} parent=1 // pred_fallthru
      _
    // Predicated region
    $region18: #{tpu_custom_call.1} parent=1 // pred_check
      _
    $region19: #{tpu_custom_call.1} parent=1 // pred_check_branch
      %56 = sbr.rel (0) target = $region21
    $region20: #{tpu_custom_call.1} parent=1 // pred_region
      _
    $region21: #{tpu_custom_call.1} parent=1 // pred_fallthru
      _
    // Predicated region
    $region22: #{tpu_custom_call.1} parent=1 // pred_check
      _
    $region23: #{tpu_custom_call.1} parent=1 // pred_check_branch
      %58 = sbr.rel (0) target = $region25
    $region24: #{tpu_custom_call.1} parent=1 // pred_region
      %60 = vsyncadd [#allocation9], 0
      %s61 = sshll.u32 %s5, 4
      %s62 = int_to_ptr.hbm [resolvable:$true] %s61
      %s63 = sshll.u32 [#allocation8], 4
      %s64 = int_to_ptr.vmem [resolvable:$true] %s63
      %69 = dma.hbm_to_vmem [thread:$0]  %s62, 8192, %s64, [#allocation9], 512, 512, 32
    $region25: #{tpu_custom_call.1} parent=1 // pred_fallthru
      _
    // Predicated region
    $region26: #{tpu_custom_call.1} parent=1 // pred_check
      _
    $region27: #{tpu_custom_call.1} parent=1 // pred_check_branch
      %71 = sbr.rel (0) target = $region29
    $region28: #{tpu_custom_call.1} parent=1 // pred_region
      _
    $region29: #{tpu_custom_call.1} parent=1 // pred_fallthru
      _
    // Predicated region
    $region30: #{tpu_custom_call.1} parent=1 // pred_check
      _
    $region31: #{tpu_custom_call.1} parent=1 // pred_check_branch
      %73 = sbr.rel (0) target = $region33
    $region32: #{tpu_custom_call.1} parent=1 // pred_region
      %75 = dma.done [#allocation3], 512
    $region33: #{tpu_custom_call.1} parent=1 // pred_fallthru
      _
    // Predicated region
    $region34: #{tpu_custom_call.1} parent=1 // pred_check
      _
    $region35: #{tpu_custom_call.1} parent=1 // pred_check_branch
      %77 = sbr.rel (0) target = $region37
    $region36: #{tpu_custom_call.1} parent=1 // pred_region
      %79 = dma.done [#allocation6], 8192
    $region37: #{tpu_custom_call.1} parent=1 // pred_fallthru
      _
    // Predicated region
    $region38: #{tpu_custom_call.1} parent=1 // pred_check
      _
    $region39: #{tpu_custom_call.1} parent=1 // pred_check_branch
      %81 = sbr.rel (0) target = $region41
    $region40: #{tpu_custom_call.1} parent=1 // pred_region
      %83 = dma.done [#allocation6], 2048
    $region41: #{tpu_custom_call.1} parent=1 // pred_fallthru
      _
    // Predicated region
    $region42: #{tpu_custom_call.1} parent=1 // pred_check
      _
    $region43: #{tpu_custom_call.1} parent=1 // pred_check_branch
      %85 = sbr.rel (0) target = $region45
    $region44: #{tpu_custom_call.1} parent=1 // pred_region
      %87 = dma.done [#allocation9], 8192
    $region45: #{tpu_custom_call.1} parent=1 // pred_fallthru
      _
    %v88 = vld [vmem:[#allocation2] sm:$0xff]
    %v89 = vld [vmem:[#allocation2 + $0x8] sm:$0xff]
    %v90 = vld [vmem:[#allocation2 + $0x10] sm:$0xff]
    %v91 = vld [vmem:[#allocation2 + $0x18] sm:$0xff]
    %v92 = vld [vmem:[#allocation5] sm:$0xff]
    %v93 = vld [vmem:[#allocation5 + $0x8] sm:$0xff]
    %v94 = vld [vmem:[#allocation5 + $0x10] sm:$0xff]
    %v95 = vld [vmem:[#allocation5 + $0x18] sm:$0xff]
    %v96 = vld [vmem:[#allocation5 + $0x20] sm:$0xff]
    %v97 = vld [vmem:[#allocation5 + $0x28] sm:$0xff]
    %v98 = vld [vmem:[#allocation5 + $0x30] sm:$0xff]
    %v99 = vld [vmem:[#allocation5 + $0x38] sm:$0xff]
    %v100 = vld [vmem:[#allocation5 + $0x40] sm:$0xff]
    %v101 = vld [vmem:[#allocation5 + $0x48] sm:$0xff]
    %v102 = vld [vmem:[#allocation5 + $0x50] sm:$0xff]
    %v103 = vld [vmem:[#allocation5 + $0x58] sm:$0xff]
    %v104 = vld [vmem:[#allocation5 + $0x60] sm:$0xff]
    %v105 = vld [vmem:[#allocation5 + $0x68] sm:$0xff]
    %v106 = vld [vmem:[#allocation5 + $0x70] sm:$0xff]
    %v107 = vld [vmem:[#allocation5 + $0x78] sm:$0xff]
    %v108 = vld [vmem:[#allocation5 + $0x80] sm:$0xff]
    %v109 = vld [vmem:[#allocation5 + $0x88] sm:$0xff]
    %v110 = vld [vmem:[#allocation5 + $0x90] sm:$0xff]
    %v111 = vld [vmem:[#allocation5 + $0x98] sm:$0xff]
    %v112 = vld [vmem:[#allocation5 + $0xa0] sm:$0xff]
    %v113 = vld [vmem:[#allocation5 + $0xa8] sm:$0xff]
    %v114 = vld [vmem:[#allocation5 + $0xb0] sm:$0xff]
    %v115 = vld [vmem:[#allocation5 + $0xb8] sm:$0xff]
    %v116 = vld [vmem:[#allocation5 + $0xc0] sm:$0xff]
    %v117 = vld [vmem:[#allocation5 + $0xc8] sm:$0xff]
    %v118 = vld [vmem:[#allocation5 + $0xd0] sm:$0xff]
    %v119 = vld [vmem:[#allocation5 + $0xd8] sm:$0xff]
    %v120 = vld [vmem:[#allocation5 + $0xe0] sm:$0xff]
    %v121 = vld [vmem:[#allocation5 + $0xe8] sm:$0xff]
    %v122 = vld [vmem:[#allocation5 + $0xf0] sm:$0xff]
    %v123 = vld [vmem:[#allocation5 + $0xf8] sm:$0xff]
    %v124 = vld [vmem:[#allocation5 + $0x100] sm:$0xff]
    %v125 = vld [vmem:[#allocation5 + $0x108] sm:$0xff]
    %v126 = vld [vmem:[#allocation5 + $0x110] sm:$0xff]
    %v127 = vld [vmem:[#allocation5 + $0x118] sm:$0xff]
    %v128 = vld [vmem:[#allocation5 + $0x120] sm:$0xff]
    %v129 = vld [vmem:[#allocation5 + $0x128] sm:$0xff]
    %v130 = vld [vmem:[#allocation5 + $0x130] sm:$0xff]
    %v131 = vld [vmem:[#allocation5 + $0x138] sm:$0xff]
    %v132 = vld [vmem:[#allocation5 + $0x140] sm:$0xff]
    %v133 = vld [vmem:[#allocation5 + $0x148] sm:$0xff]
    %v134 = vld [vmem:[#allocation5 + $0x150] sm:$0xff]
    %v135 = vld [vmem:[#allocation5 + $0x158] sm:$0xff]
    %v136 = vld [vmem:[#allocation5 + $0x160] sm:$0xff]
    %v137 = vld [vmem:[#allocation5 + $0x168] sm:$0xff]
    %v138 = vld [vmem:[#allocation5 + $0x170] sm:$0xff]
    %v139 = vld [vmem:[#allocation5 + $0x178] sm:$0xff]
    %v140 = vld [vmem:[#allocation5 + $0x180] sm:$0xff]
    %v141 = vld [vmem:[#allocation5 + $0x188] sm:$0xff]
    %v142 = vld [vmem:[#allocation5 + $0x190] sm:$0xff]
    %v143 = vld [vmem:[#allocation5 + $0x198] sm:$0xff]
    %v144 = vld [vmem:[#allocation5 + $0x1a0] sm:$0xff]
    %v145 = vld [vmem:[#allocation5 + $0x1a8] sm:$0xff]
    %v146 = vld [vmem:[#allocation5 + $0x1b0] sm:$0xff]
    %v147 = vld [vmem:[#allocation5 + $0x1b8] sm:$0xff]
    %v148 = vld [vmem:[#allocation5 + $0x1c0] sm:$0xff]
    %v149 = vld [vmem:[#allocation5 + $0x1c8] sm:$0xff]
    %v150 = vld [vmem:[#allocation5 + $0x1d0] sm:$0xff]
    %v151 = vld [vmem:[#allocation5 + $0x1d8] sm:$0xff]
    %v152 = vld [vmem:[#allocation5 + $0x1e0] sm:$0xff]
    %v153 = vld [vmem:[#allocation5 + $0x1e8] sm:$0xff]
    %v154 = vld [vmem:[#allocation5 + $0x1f0] sm:$0xff]
    %v155 = vld [vmem:[#allocation5 + $0x1f8] sm:$0xff]
    %v156 = vld [vmem:[%s2] sm:$0x1]
    %v158 = vperm.slane %v156, 0
    %160 = vmatpush.msra.mxu0 %v107
    %161 = vmatpush.msra.mxu0 %v106
    %162 = vmatpush.msra.mxu0 %v105
    %163 = vmatpush.msra.mxu0 %v104
    %164 = vmatpush.msra.mxu0 %v103
    %165 = vmatpush.msra.mxu0 %v102
    %166 = vmatpush.msra.mxu0 %v101
    %167 = vmatpush.msra.mxu0 %v100
    %168 = vmatpush.msra.mxu0 %v99
    %169 = vmatpush.msra.mxu0 %v98
    %170 = vmatpush.msra.mxu0 %v97
    %171 = vmatpush.msra.mxu0 %v96
    %172 = vmatpush.msra.mxu0 %v95
    %173 = vmatpush.msra.mxu0 %v94
    %174 = vmatpush.msra.mxu0 %v93
    %175 = vmatpush.msra.mxu0 %v92
    %176 = vmatmul.f32.gmra.mxu0 %v88
    %v177 = vpop.f32.mrf.mxu0
    %v178 = vadd.f32 %v158, %v177
    %179 = vdwg.mxu0
    %180 = vmatpush.msra.mxu0 %v123
    %181 = vmatpush.msra.mxu0 %v122
    %182 = vmatpush.msra.mxu0 %v121
    %183 = vmatpush.msra.mxu0 %v120
    %184 = vmatpush.msra.mxu0 %v119
    %185 = vmatpush.msra.mxu0 %v118
    %186 = vmatpush.msra.mxu0 %v117
    %187 = vmatpush.msra.mxu0 %v116
    %188 = vmatpush.msra.mxu0 %v115
    %189 = vmatpush.msra.mxu0 %v114
    %190 = vmatpush.msra.mxu0 %v113
    %191 = vmatpush.msra.mxu0 %v112
    %192 = vmatpush.msra.mxu0 %v111
    %193 = vmatpush.msra.mxu0 %v110
    %194 = vmatpush.msra.mxu0 %v109
    %195 = vmatpush.msra.mxu0 %v108
    %196 = vmatmul.f32.gmra.mxu0 %v89
    %v197 = vpop.f32.mrf.mxu0
    %v198 = vadd.f32 %v178, %v197
    %199 = vdwg.mxu0
    %200 = vmatpush.msra.mxu0 %v139
    %201 = vmatpush.msra.mxu0 %v138
    %202 = vmatpush.msra.mxu0 %v137
    %203 = vmatpush.msra.mxu0 %v136
    %204 = vmatpush.msra.mxu0 %v135
    %205 = vmatpush.msra.mxu0 %v134
    %206 = vmatpush.msra.mxu0 %v133
    %207 = vmatpush.msra.mxu0 %v132
    %208 = vmatpush.msra.mxu0 %v131
    %209 = vmatpush.msra.mxu0 %v130
    %210 = vmatpush.msra.mxu0 %v129
    %211 = vmatpush.msra.mxu0 %v128
    %212 = vmatpush.msra.mxu0 %v127
    %213 = vmatpush.msra.mxu0 %v126
    %214 = vmatpush.msra.mxu0 %v125
    %215 = vmatpush.msra.mxu0 %v124
    %216 = vmatmul.f32.gmra.mxu0 %v90
    %v217 = vpop.f32.mrf.mxu0
    %v218 = vadd.f32 %v198, %v217
    %219 = vdwg.mxu0
    %220 = vmatpush.msra.mxu0 %v155
    %221 = vmatpush.msra.mxu0 %v154
    %222 = vmatpush.msra.mxu0 %v153
    %223 = vmatpush.msra.mxu0 %v152
    %224 = vmatpush.msra.mxu0 %v151
    %225 = vmatpush.msra.mxu0 %v150
    %226 = vmatpush.msra.mxu0 %v149
    %227 = vmatpush.msra.mxu0 %v148
    %228 = vmatpush.msra.mxu0 %v147
    %229 = vmatpush.msra.mxu0 %v146
    %230 = vmatpush.msra.mxu0 %v145
    %231 = vmatpush.msra.mxu0 %v144
    %232 = vmatpush.msra.mxu0 %v143
    %233 = vmatpush.msra.mxu0 %v142
    %234 = vmatpush.msra.mxu0 %v141
    %235 = vmatpush.msra.mxu0 %v140
    %236 = vmatmul.f32.gmra.mxu0 %v91
    %v237 = vpop.f32.mrf.mxu0
    %v238 = vadd.f32 %v218, %v237
    %239 = vdwg.mxu0
    %v240 = vmax.f32 %v238, 0.0
    %v241 = vld [vmem:[#allocation7] sm:$0xff]
    %v242 = vld [vmem:[#allocation7 + $0x8] sm:$0xff]
    %v243 = vld [vmem:[#allocation7 + $0x10] sm:$0xff]
    %v244 = vld [vmem:[#allocation7 + $0x18] sm:$0xff]
    %v245 = vld [vmem:[#allocation7 + $0x20] sm:$0xff]
    %v246 = vld [vmem:[#allocation7 + $0x28] sm:$0xff]
    %v247 = vld [vmem:[#allocation7 + $0x30] sm:$0xff]
    %v248 = vld [vmem:[#allocation7 + $0x38] sm:$0xff]
    %v249 = vld [vmem:[#allocation7 + $0x40] sm:$0xff]
    %v250 = vld [vmem:[#allocation7 + $0x48] sm:$0xff]
    %v251 = vld [vmem:[#allocation7 + $0x50] sm:$0xff]
    %v252 = vld [vmem:[#allocation7 + $0x58] sm:$0xff]
    %v253 = vld [vmem:[#allocation7 + $0x60] sm:$0xff]
    %v254 = vld [vmem:[#allocation7 + $0x68] sm:$0xff]
    %v255 = vld [vmem:[#allocation7 + $0x70] sm:$0xff]
    %v256 = vld [vmem:[#allocation7 + $0x78] sm:$0xff]
    %v257 = vld [vmem:[%s4] sm:$0x1]
    %v259 = vperm.slane %v257, 0
    %261 = vmatpush.msra.mxu0 %v256
    %262 = vmatpush.msra.mxu0 %v255
    %263 = vmatpush.msra.mxu0 %v254
    %264 = vmatpush.msra.mxu0 %v253
    %265 = vmatpush.msra.mxu0 %v252
    %266 = vmatpush.msra.mxu0 %v251
    %267 = vmatpush.msra.mxu0 %v250
    %268 = vmatpush.msra.mxu0 %v249
    %269 = vmatpush.msra.mxu0 %v248
    %270 = vmatpush.msra.mxu0 %v247
    %271 = vmatpush.msra.mxu0 %v246
    %272 = vmatpush.msra.mxu0 %v245
    %273 = vmatpush.msra.mxu0 %v244
    %274 = vmatpush.msra.mxu0 %v243
    %275 = vmatpush.msra.mxu0 %v242
    %276 = vmatpush.msra.mxu0 %v241
    %277 = vmatmul.f32.gmra.mxu0 %v240
    %v278 = vpop.f32.mrf.mxu0
    %v279 = vadd.f32 %v259, %v278
    %280 = vdwg.mxu0
    %v281 = vtanh.pop %v279
    %v282 = vld [vmem:[#allocation8] sm:$0xff]
    %v283 = vld [vmem:[#allocation8 + $0x8] sm:$0xff]
    %v284 = vld [vmem:[#allocation8 + $0x10] sm:$0xff]
    %v285 = vld [vmem:[#allocation8 + $0x18] sm:$0xff]
    %v286 = vld [vmem:[#allocation8 + $0x20] sm:$0xff]
    %v287 = vld [vmem:[#allocation8 + $0x28] sm:$0xff]
    %v288 = vld [vmem:[#allocation8 + $0x30] sm:$0xff]
    %v289 = vld [vmem:[#allocation8 + $0x38] sm:$0xff]
    %v290 = vld [vmem:[#allocation8 + $0x40] sm:$0xff]
    %v291 = vld [vmem:[#allocation8 + $0x48] sm:$0xff]
    %v292 = vld [vmem:[#allocation8 + $0x50] sm:$0xff]
    %v293 = vld [vmem:[#allocation8 + $0x58] sm:$0xff]
    %v294 = vld [vmem:[#allocation8 + $0x60] sm:$0xff]
    %v295 = vld [vmem:[#allocation8 + $0x68] sm:$0xff]
    %v296 = vld [vmem:[#allocation8 + $0x70] sm:$0xff]
    %v297 = vld [vmem:[#allocation8 + $0x78] sm:$0xff]
    %v298 = vld [vmem:[#allocation8 + $0x80] sm:$0xff]
    %v299 = vld [vmem:[#allocation8 + $0x88] sm:$0xff]
    %v300 = vld [vmem:[#allocation8 + $0x90] sm:$0xff]
    %v301 = vld [vmem:[#allocation8 + $0x98] sm:$0xff]
    %v302 = vld [vmem:[#allocation8 + $0xa0] sm:$0xff]
    %v303 = vld [vmem:[#allocation8 + $0xa8] sm:$0xff]
    %v304 = vld [vmem:[#allocation8 + $0xb0] sm:$0xff]
    %v305 = vld [vmem:[#allocation8 + $0xb8] sm:$0xff]
    %v306 = vld [vmem:[#allocation8 + $0xc0] sm:$0xff]
    %v307 = vld [vmem:[#allocation8 + $0xc8] sm:$0xff]
    %v308 = vld [vmem:[#allocation8 + $0xd0] sm:$0xff]
    %v309 = vld [vmem:[#allocation8 + $0xd8] sm:$0xff]
    %v310 = vld [vmem:[#allocation8 + $0xe0] sm:$0xff]
    %v311 = vld [vmem:[#allocation8 + $0xe8] sm:$0xff]
    %v312 = vld [vmem:[#allocation8 + $0xf0] sm:$0xff]
    %v313 = vld [vmem:[#allocation8 + $0xf8] sm:$0xff]
    %v314 = vld [vmem:[#allocation8 + $0x100] sm:$0xff]
    %v315 = vld [vmem:[#allocation8 + $0x108] sm:$0xff]
    %v316 = vld [vmem:[#allocation8 + $0x110] sm:$0xff]
    %v317 = vld [vmem:[#allocation8 + $0x118] sm:$0xff]
    %v318 = vld [vmem:[#allocation8 + $0x120] sm:$0xff]
    %v319 = vld [vmem:[#allocation8 + $0x128] sm:$0xff]
    %v320 = vld [vmem:[#allocation8 + $0x130] sm:$0xff]
    %v321 = vld [vmem:[#allocation8 + $0x138] sm:$0xff]
    %v322 = vld [vmem:[#allocation8 + $0x140] sm:$0xff]
    %v323 = vld [vmem:[#allocation8 + $0x148] sm:$0xff]
    %v324 = vld [vmem:[#allocation8 + $0x150] sm:$0xff]
    %v325 = vld [vmem:[#allocation8 + $0x158] sm:$0xff]
    %v326 = vld [vmem:[#allocation8 + $0x160] sm:$0xff]
    %v327 = vld [vmem:[#allocation8 + $0x168] sm:$0xff]
    %v328 = vld [vmem:[#allocation8 + $0x170] sm:$0xff]
    %v329 = vld [vmem:[#allocation8 + $0x178] sm:$0xff]
    %v330 = vld [vmem:[#allocation8 + $0x180] sm:$0xff]
    %v331 = vld [vmem:[#allocation8 + $0x188] sm:$0xff]
    %v332 = vld [vmem:[#allocation8 + $0x190] sm:$0xff]
    %v333 = vld [vmem:[#allocation8 + $0x198] sm:$0xff]
    %v334 = vld [vmem:[#allocation8 + $0x1a0] sm:$0xff]
    %v335 = vld [vmem:[#allocation8 + $0x1a8] sm:$0xff]
    %v336 = vld [vmem:[#allocation8 + $0x1b0] sm:$0xff]
    %v337 = vld [vmem:[#allocation8 + $0x1b8] sm:$0xff]
    %v338 = vld [vmem:[#allocation8 + $0x1c0] sm:$0xff]
    %v339 = vld [vmem:[#allocation8 + $0x1c8] sm:$0xff]
    %v340 = vld [vmem:[#allocation8 + $0x1d0] sm:$0xff]
    %v341 = vld [vmem:[#allocation8 + $0x1d8] sm:$0xff]
    %v342 = vld [vmem:[#allocation8 + $0x1e0] sm:$0xff]
    %v343 = vld [vmem:[#allocation8 + $0x1e8] sm:$0xff]
    %v344 = vld [vmem:[#allocation8 + $0x1f0] sm:$0xff]
    %v345 = vld [vmem:[#allocation8 + $0x1f8] sm:$0xff]
    %v346 = vld [vmem:[%s6] sm:$0xf]
    %v348 = vperm.slane %v346, 0
    %v349 = vperm.slane %v346, 1
    %v350 = vperm.slane %v346, 2
    %v351 = vperm.slane %v346, 3
    %356 = vmatpush.msra.mxu0 %v342
    %357 = vmatpush.msra.mxu0 %v338
    %358 = vmatpush.msra.mxu0 %v334
    %359 = vmatpush.msra.mxu0 %v330
    %360 = vmatpush.msra.mxu0 %v326
    %361 = vmatpush.msra.mxu0 %v322
    %362 = vmatpush.msra.mxu0 %v318
    %363 = vmatpush.msra.mxu0 %v314
    %364 = vmatpush.msra.mxu0 %v310
    %365 = vmatpush.msra.mxu0 %v306
    %366 = vmatpush.msra.mxu0 %v302
    %367 = vmatpush.msra.mxu0 %v298
    %368 = vmatpush.msra.mxu0 %v294
    %369 = vmatpush.msra.mxu0 %v290
    %370 = vmatpush.msra.mxu0 %v286
    %371 = vmatpush.msra.mxu0 %v282
    %372 = vmatmul.f32.gmra.mxu0 %v281
    %v373 = vpop.f32.mrf.mxu0
    %v374 = vadd.f32 %v348, %v373
    %375 = vdwg.mxu0
    %376 = vmatpush.msra.mxu0 %v343
    %377 = vmatpush.msra.mxu0 %v339
    %378 = vmatpush.msra.mxu0 %v335
    %379 = vmatpush.msra.mxu0 %v331
    %380 = vmatpush.msra.mxu0 %v327
    %381 = vmatpush.msra.mxu0 %v323
    %382 = vmatpush.msra.mxu0 %v319
    %383 = vmatpush.msra.mxu0 %v315
    %384 = vmatpush.msra.mxu0 %v311
    %385 = vmatpush.msra.mxu0 %v307
    %386 = vmatpush.msra.mxu0 %v303
    %387 = vmatpush.msra.mxu0 %v299
    %388 = vmatpush.msra.mxu0 %v295
    %389 = vmatpush.msra.mxu0 %v291
    %390 = vmatpush.msra.mxu0 %v287
    %391 = vmatpush.msra.mxu0 %v283
    %392 = vmatmul.f32.gmra.mxu0 %v281
    %v393 = vpop.f32.mrf.mxu0
    %v394 = vadd.f32 %v349, %v393
    %395 = vdwg.mxu0
    %396 = vmatpush.msra.mxu0 %v344
    %397 = vmatpush.msra.mxu0 %v340
    %398 = vmatpush.msra.mxu0 %v336
    %399 = vmatpush.msra.mxu0 %v332
    %400 = vmatpush.msra.mxu0 %v328
    %401 = vmatpush.msra.mxu0 %v324
    %402 = vmatpush.msra.mxu0 %v320
    %403 = vmatpush.msra.mxu0 %v316
    %404 = vmatpush.msra.mxu0 %v312
    %405 = vmatpush.msra.mxu0 %v308
    %406 = vmatpush.msra.mxu0 %v304
    %407 = vmatpush.msra.mxu0 %v300
    %408 = vmatpush.msra.mxu0 %v296
    %409 = vmatpush.msra.mxu0 %v292
    %410 = vmatpush.msra.mxu0 %v288
    %411 = vmatpush.msra.mxu0 %v284
    %412 = vmatmul.f32.gmra.mxu0 %v281
    %v413 = vpop.f32.mrf.mxu0
    %v414 = vadd.f32 %v350, %v413
    %415 = vdwg.mxu0
    %416 = vmatpush.msra.mxu0 %v345
    %417 = vmatpush.msra.mxu0 %v341
    %418 = vmatpush.msra.mxu0 %v337
    %419 = vmatpush.msra.mxu0 %v333
    %420 = vmatpush.msra.mxu0 %v329
    %421 = vmatpush.msra.mxu0 %v325
    %422 = vmatpush.msra.mxu0 %v321
    %423 = vmatpush.msra.mxu0 %v317
    %424 = vmatpush.msra.mxu0 %v313
    %425 = vmatpush.msra.mxu0 %v309
    %426 = vmatpush.msra.mxu0 %v305
    %427 = vmatpush.msra.mxu0 %v301
    %428 = vmatpush.msra.mxu0 %v297
    %429 = vmatpush.msra.mxu0 %v293
    %430 = vmatpush.msra.mxu0 %v289
    %431 = vmatpush.msra.mxu0 %v285
    %432 = vmatmul.f32.gmra.mxu0 %v281
    %v433 = vpop.f32.mrf.mxu0
    %v434 = vadd.f32 %v351, %v433
    %435 = vdwg.mxu0
    %v436 = vadd.f32 %v374, %v88
    %v437 = vadd.f32 %v394, %v89
    %v438 = vadd.f32 %v414, %v90
    %v439 = vadd.f32 %v434, %v91
    %440 = vst [vmem:[#allocation10] sm:$0xff] %v436
    %441 = vst [vmem:[#allocation10 + $0x8] sm:$0xff] %v437
    %442 = vst [vmem:[#allocation10 + $0x10] sm:$0xff] %v438
    %443 = vst [vmem:[#allocation10 + $0x18] sm:$0xff] %v439
    // Predicated region
    $region46: #{tpu_custom_call.1} parent=1 // pred_check
      _
    $region47: #{tpu_custom_call.1} parent=1 // pred_check_branch
      %445 = sbr.rel (0) target = $region49
    $region48: #{tpu_custom_call.1} parent=1 // pred_region
      %447 = vsyncadd [#allocation4], 0
      %s449 = sshll.u32 [#allocation10], 4
      %s450 = int_to_ptr.vmem [resolvable:$true] %s449
      %s451 = sshll.u32 %s7, 4
      %s452 = int_to_ptr.hbm [resolvable:$true] %s451
      %454 = dma.vmem_to_hbm [thread:$0]  %s450, 512, %s452, [#allocation4]
    $region49: #{tpu_custom_call.1} parent=1 // pred_fallthru
      _
    // Predicated region
    $region50: #{tpu_custom_call.1} parent=1 // pred_check
      _
    $region51: #{tpu_custom_call.1} parent=1 // pred_check_branch
      %456 = sbr.rel (0) target = $region53
    $region52: #{tpu_custom_call.1} parent=1 // pred_region
      %458 = dma.done [#allocation4], 512
    $region53: #{tpu_custom_call.1} parent=1 // pred_fallthru
      _
    %459 = vsyncpa [#allocation3], 1
    %460 = vsyncpa [#allocation6], 1
    %461 = vsyncpa [#allocation9], 1
    %462 = vsyncpa [#allocation4], 1

</llo_original>
